<compile_context>
chip_gen: v6e
topology: v6e:2x2x1
jax: 0.10.0
libtpu: 0.0.40
codegen_flags: <defaults>
</compile_context>

<pallas_src>
import functools

import jax
import jax.numpy as jnp
from jax import lax
from jax.experimental import pallas as pl
from jax.experimental.pallas import tpu as pltpu


def _round_up(x, m):
    return ((x + m - 1) // m) * m


def _vmem_limits():
    """(vmem_limit_bytes, block_budget_cap) per TPU generation.
    v7x has 64 MiB physical VMEM; v5e/v6e have 128 MiB."""
    kind = ""
    try:
        kind = jax.devices()[0].device_kind.lower()
    except Exception:
        pass
    if ("v7" in kind) or ("7x" in kind):
        return 48 * 2**20, 24 * 2**20
    return 64 * 2**20, 40 * 2**20


def _pick_time_tile(T, d, cin, cout, itemsize, block_budget):
    """Lane-dense (multiple-of-128) time tile: big enough that the 2*d halo
    re-read is amortized (target ~16*d), capped at 2048, shrunk to fit the
    double-buffered block budget."""
    cap = 2048
    target = max(128, min(cap, _round_up(16 * d, 128)))
    if T >= 128:
        target = min(target, (T // 128) * 128)
    tT = max(128, target)

    def blocks_bytes(t):
        halo = _round_up(t + 2 * d, 128)
        return 2 * (cin * halo + cout * t) * itemsize   # x2: double buffering

    while tT > 128 and blocks_bytes(tT) > block_budget:
        tT -= 128
    return tT


# ---------------------------------------------------------------------------
# Kernels
# ---------------------------------------------------------------------------

def _fullrow_kernel(x_ref, w1_ref, b1_ref, w2_ref, b2_ref, o_ref, *, d, T):
    # x_ref : (1, Cin, T)   w1_ref: (3, Cout, Cin)   b1/b2: (Cout, 1) f32
    # w2_ref: (Cout, Cout)  o_ref : (1, Cout, T)
    x = x_ref[0]                                            # (Cin, T), compute dtype
    col = lax.broadcasted_iota(jnp.int32, x.shape, 1)
    zero = jnp.zeros_like(x)

    # Conv 'same' padding handled in-register: tap0[:, j] = x[:, j-d] (0 for j<d),
    # tap2[:, j] = x[:, j+d] (0 for j>=T-d).  Static lane rolls (XLU) + masks.
    s = d % T
    tap0 = jnp.where(col >= d, pltpu.roll(x, s, axis=1), zero)
    tap2 = jnp.where(col < T - d, pltpu.roll(x, (T - s) % T, axis=1), zero)

    acc = jnp.dot(w1_ref[1], x, preferred_element_type=jnp.float32)
    acc = acc + jnp.dot(w1_ref[0], tap0, preferred_element_type=jnp.float32)
    acc = acc + jnp.dot(w1_ref[2], tap2, preferred_element_type=jnp.float32)
    acc = acc + b1_ref[...]

    h = jnp.maximum(acc, 0.0).astype(w2_ref.dtype)          # ReLU
    z = jnp.dot(w2_ref[...], h, preferred_element_type=jnp.float32) + b2_ref[...]

    # Dropout is identity in eval mode; residual add in f32.
    o_ref[0] = (x.astype(jnp.float32) + z).astype(o_ref.dtype)


def _tiled_kernel(xw_ref, w1_ref, b1_ref, w2_ref, b2_ref, o_ref, *, d, tile_t):
    # xw_ref: (1, Cin, halo) zero-padded haloed time window; window column (d + j)
    # holds input time (tile_start + j).  o_ref: (1, Cout, tile_t).
    xw = xw_ref[0]                                          # (Cin, halo)

    acc = jnp.dot(w1_ref[0], xw[:, 0:tile_t], preferred_element_type=jnp.float32)
    acc = acc + jnp.dot(w1_ref[1], xw[:, d:d + tile_t],
                        preferred_element_type=jnp.float32)
    acc = acc + jnp.dot(w1_ref[2], xw[:, 2 * d:2 * d + tile_t],
                        preferred_element_type=jnp.float32)
    acc = acc + b1_ref[...]

    h = jnp.maximum(acc, 0.0).astype(w2_ref.dtype)          # ReLU
    z = jnp.dot(w2_ref[...], h, preferred_element_type=jnp.float32) + b2_ref[...]

    x_center = xw[:, d:d + tile_t].astype(jnp.float32)
    o_ref[0] = (x_center + z).astype(o_ref.dtype)


# ---------------------------------------------------------------------------
# Wrapper
# ---------------------------------------------------------------------------

def dilated_residual_layer(x, w1, b1, w2, b2, dilation, *,
                           use_bf16=False, time_tile=None, force_tiled=False):
    """PyTorch-layout forward: x (N, C, T) -> (N, C, T).
    w1: (Cout, Cin, 3), b1: (Cout,), w2: (Cout, Cout, 1), b2: (Cout,)."""
    N, Cin, T = x.shape
    Cout, Cin_w, K = w1.shape
    assert K == 3 and Cin_w == Cin, "conv_dilated weight must be (Cout, Cin, 3)"
    assert Cout == Cin, "residual add requires in_channels == out_channels"
    assert w2.shape == (Cout, Cout, 1) and b1.shape == (Cout,) and b2.shape == (Cout,)
    d = int(dilation)
    assert d >= 1

    out_dtype = x.dtype
    cdt = jnp.bfloat16 if use_bf16 else x.dtype
    itemsize = jnp.dtype(cdt).itemsize
    out_itemsize = jnp.dtype(out_dtype).itemsize

    vmem_limit, budget_cap = _vmem_limits()
    w_bytes = (3 * Cout * Cin + Cout * Cout) * itemsize + 2 * Cout * 4
    block_budget = max(2 * 2**20,
                       min(budget_cap, vmem_limit - 2 * w_bytes - 8 * 2**20))

    # One-time weight reformat (tap-major conv weight, squeezed 1x1 weight).
    w1_t = jnp.transpose(w1, (2, 0, 1)).astype(cdt)          # (3, Cout, Cin)
    w2_m = w2[:, :, 0].astype(cdt)                           # (Cout, Cout)
    b1_c = b1.reshape(Cout, 1).astype(jnp.float32)
    b2_c = b2.reshape(Cout, 1).astype(jnp.float32)
    x_c = x.astype(cdt)
    weight_args = (w1_t, b1_c, w2_m, b2_c)

    flops = 2 * N * T * Cout * (3 * Cin + Cout)

    def weight_specs(rank):
        if rank == 1:
            z3 = lambda n: (0, 0, 0)
            z2 = lambda n: (0, 0)
        else:
            z3 = lambda t, n: (0, 0, 0)
            z2 = lambda t, n: (0, 0)
        return [
            pl.BlockSpec((3, Cout, Cin), z3),
            pl.BlockSpec((Cout, 1), z2),
            pl.BlockSpec((Cout, Cout), z2),
            pl.BlockSpec((Cout, 1), z2),
        ]

    # ---- full-row path: whole (Cin, T) row resident, no HBM pad pass ----
    fullrow_blocks = 2 * (Cin + Cout) * T * itemsize
    use_fullrow = (not force_tiled) and time_tile is None and \
        fullrow_blocks <= block_budget

    if use_fullrow:
        kernel = functools.partial(_fullrow_kernel, d=d, T=T)
        bytes_accessed = N * T * (Cin * itemsize + Cout * out_itemsize) + w_bytes
        return pl.pallas_call(
            kernel,
            out_shape=jax.ShapeDtypeStruct((N, Cout, T), out_dtype),
            grid_spec=pltpu.PrefetchScalarGridSpec(
                num_scalar_prefetch=0,
                grid=(N,),
                in_specs=[pl.BlockSpec((1, Cin, T), lambda n: (n, 0, 0))]
                         + weight_specs(1),
                out_specs=pl.BlockSpec((1, Cout, T), lambda n: (n, 0, 0)),
            ),
            compiler_params=pltpu.CompilerParams(
                dimension_semantics=("parallel",),
                vmem_limit_bytes=vmem_limit),
            cost_estimate=pl.CostEstimate(flops=flops, transcendentals=0,
                                          bytes_accessed=bytes_accessed),
        )(x_c, *weight_args)

    # ---- tiled path: haloed element-indexed time windows ----
    if time_tile is not None:
        tT = int(time_tile)
    else:
        tT = _pick_time_tile(T, d, Cin, Cout, itemsize, block_budget)
    if T < 128:
        tT = T                                   # single tile == full time axis
    else:
        tT = max(128, min(_round_up(tT, 128), (T // 128) * 128))
    nT = (T + tT - 1) // tT
    halo = _round_up(tT + 2 * d, 128)            # lane-aligned haloed window
    Tp = (nT - 1) * tT + halo                    # padded extent the windows index

    # One zero-pad pass in HBM (conv 'same' pad + tile/halo rounding); fuses with
    # the bf16 cast when enabled.  TODO(synk): see header, removable with dynamic
    # in-kernel lane shifts.
    x_pad = jnp.pad(x_c, ((0, 0), (0, 0), (d, Tp - T - d)))

    kernel = functools.partial(_tiled_kernel, d=d, tile_t=tT)
    bytes_accessed = (N * nT * Cin * halo * itemsize     # haloed input reads
                      + N * T * Cout * out_itemsize      # output write
                      + w_bytes)
    return pl.pallas_call(
        kernel,
        out_shape=jax.ShapeDtypeStruct((N, Cout, T), out_dtype),
        grid_spec=pltpu.PrefetchScalarGridSpec(
            num_scalar_prefetch=0,
            grid=(nT, N),                        # larger axis first (megacore)
            in_specs=[pl.BlockSpec((1, Cin, pl.Element(halo)),
                                   lambda t, n: (n, 0, t * tT))]
                     + weight_specs(2),
            out_specs=pl.BlockSpec((1, Cout, tT), lambda t, n: (n, 0, t)),
        ),
        compiler_params=pltpu.CompilerParams(
            dimension_semantics=("parallel", "parallel"),
            vmem_limit_bytes=vmem_limit),
        cost_estimate=pl.CostEstimate(flops=flops, transcendentals=0,
                                      bytes_accessed=bytes_accessed),
    )(x_pad, *weight_args)


# ---------------------------------------------------------------------------
# Reference + self-test
# ---------------------------------------------------------------------------

def _reference(x, w1, b1, w2, b2, dilation):
    """Plain-JAX reference of the PyTorch forward (dropout in eval mode)."""
    d = int(dilation)
    T = x.shape[-1]
    xp = jnp.pad(x, ((0, 0), (0, 0), (d, d)))
    acc = b1[None, :, None]
    for k in range(3):
        acc = acc + jnp.einsum("oi,nit->not", w1[:, :, k], xp[:, :, k * d:k * d + T])
    h = jnp.maximum(acc, 0.0)
    z = jnp.einsum("oi,nit->not", w2[:, :, 0], h) + b2[None, :, None]
    return x + z


if __name__ == "__main__":
    # Small deterministic setup consistent with DilatedResidualLayer(dilation=2, C, C).
    N, C, T = 2, 16, 64
    dilation = 2

    key = jax.random.PRNGKey(0)
    kx, kw1, kb1, kw2, kb2, kx2 = jax.random.split(key, 6)

    x = jax.random.normal(kx, (N, C, T), dtype=jnp.float32)           # NCT like PyTorch
    w1 = jax.random.normal(kw1, (C, C, 3), dtype=jnp.float32) * 0.1   # Conv1d(C, C, 3)
    b1 = jax.random.normal(kb1, (C,), dtype=jnp.float32) * 0.1
    w2 = jax.random.normal(kw2, (C, C, 1), dtype=jnp.float32) * 0.1   # Conv1d(C, C, 1)
    b2 = jax.random.normal(kb2, (C,), dtype=jnp.float32) * 0.1

    ref = _reference(x, w1, b1, w2, b2, dilation)

    # 1) full-row path (no HBM padding pass; conv pad handled in-kernel).
    out_full = jax.block_until_ready(
        dilated_residual_layer(x, w1, b1, w2, b2, dilation))
    assert out_full.shape == (N, C, T)
    assert jnp.allclose(out_full, ref, atol=5e-3, rtol=5e-3), "mismatch (full-row path)"

    # 2) tiled path on the same small problem (exercises haloed element windows).
    out_tiled_small = jax.block_until_ready(
        dilated_residual_layer(x, w1, b1, w2, b2, dilation, force_tiled=True))
    assert jnp.allclose(out_tiled_small, ref, atol=5e-3, rtol=5e-3), \
        "mismatch (tiled path, small T)"

    # 3) tiled path with several 128-wide lane tiles + a partial last block.
    T2, d2 = 520, 4
    x2 = jax.random.normal(kx2, (N, C, T2), dtype=jnp.float32)
    ref2 = _reference(x2, w1, b1, w2, b2, d2)
    out_tiled = jax.block_until_ready(
        dilated_residual_layer(x2, w1, b1, w2, b2, d2,
                               force_tiled=True, time_tile=128))
    assert out_tiled.shape == (N, C, T2)
    assert jnp.allclose(out_tiled, ref2, atol=5e-3, rtol=5e-3), "mismatch (tiled path)"

    # 4) bf16 compute path (flag-gated; looser numerics).
    out_bf16 = jax.block_until_ready(
        dilated_residual_layer(x, w1, b1, w2, b2, dilation, use_bf16=True))
    assert jnp.allclose(out_bf16, ref, atol=8e-2, rtol=8e-2), "mismatch (bf16 path)"

    print("KERNEL_OK")
</pallas_src>

<mosaic_0001>
module attributes {stable_mosaic.version = 11 : i64} {
  func.func @_fullrow_kernel(%arg0: i32, %arg1: memref<1x16x64xf32, #tpu.memory_space<vmem>>, %arg2: memref<3x16x16xf32, #tpu.memory_space<vmem>>, %arg3: memref<16x1xf32, #tpu.memory_space<vmem>>, %arg4: memref<16x16xf32, #tpu.memory_space<vmem>>, %arg5: memref<16x1xf32, #tpu.memory_space<vmem>>, %arg6: memref<1x16x64xf32, #tpu.memory_space<vmem>>) attributes {dimension_semantics = [#tpu.dimension_semantics<parallel>], iteration_bounds = array<i64: 2>, scalar_prefetch = 0 : i64, scratch_operands = 0 : i64, tpu.core_type = #tpu.core_type<tc>, window_params = [{transform_indices = @transform_0, window_bounds = array<i64: 1, 16, 64>}, {pipeline_mode = #tpu.pipeline_mode<synchronous>, transform_indices = @transform_1, window_bounds = array<i64: 3, 16, 16>}, {pipeline_mode = #tpu.pipeline_mode<synchronous>, transform_indices = @transform_2, window_bounds = array<i64: 16, 1>}, {pipeline_mode = #tpu.pipeline_mode<synchronous>, transform_indices = @transform_3, window_bounds = array<i64: 16, 16>}, {pipeline_mode = #tpu.pipeline_mode<synchronous>, transform_indices = @transform_4, window_bounds = array<i64: 16, 1>}, {transform_indices = @transform_5, window_bounds = array<i64: 1, 16, 64>}]} {
    %c0 = arith.constant 0 : index
    %c0_0 = arith.constant 0 : index
    %c0_1 = arith.constant 0 : index
    %0 = vector.load %arg1[%c0, %c0_0, %c0_1] : memref<1x16x64xf32, #tpu.memory_space<vmem>>, vector<1x16x64xf32>
    %1 = vector.shape_cast %0 : vector<1x16x64xf32> to vector<16x64xf32>
    %2 = tpu.iota {dimensions = array<i32: 1>} : vector<16x64xi32>
    %cst = arith.constant 0.000000e+00 : f32
    %3 = vector.broadcast %cst : f32 to vector<16x64xf32>
    %c2_i32 = arith.constant 2 : i32
    %4 = vector.broadcast %c2_i32 : i32 to vector<16x64xi32>
    %5 = arith.cmpi sge, %2, %4 : vector<16x64xi32>
    %c2_i32_2 = arith.constant 2 : i32
    %6 = tpu.dynamic_rotate %1 by %c2_i32_2 dim 1 : vector<16x64xf32>, i32 -> vector<16x64xf32>
    %7 = arith.select %5, %6, %3 : vector<16x64xi1>, vector<16x64xf32>
    %c62_i32 = arith.constant 62 : i32
    %8 = vector.broadcast %c62_i32 : i32 to vector<16x64xi32>
    %9 = arith.cmpi slt, %2, %8 : vector<16x64xi32>
    %c62_i32_3 = arith.constant 62 : i32
    %10 = tpu.dynamic_rotate %1 by %c62_i32_3 dim 1 : vector<16x64xf32>, i32 -> vector<16x64xf32>
    %11 = arith.select %9, %10, %3 : vector<16x64xi1>, vector<16x64xf32>
    %c1 = arith.constant 1 : index
    %c0_4 = arith.constant 0 : index
    %c0_5 = arith.constant 0 : index
    %12 = vector.load %arg2[%c1, %c0_4, %c0_5] : memref<3x16x16xf32, #tpu.memory_space<vmem>>, vector<1x16x16xf32>
    %13 = vector.shape_cast %12 : vector<1x16x16xf32> to vector<16x16xf32>
    %cst_6 = arith.constant dense<0.000000e+00> : vector<16x64xf32>
    %14 = tpu.matmul %13, %1, %cst_6 {dimension_numbers = #tpu.dot_dimension_numbers<[1], [0], [0], [1], [0, 0, 1, 1], [], []>} : vector<16x16xf32>, vector<16x64xf32>, vector<16x64xf32> -> vector<16x64xf32>
    %c0_7 = arith.constant 0 : index
    %c0_8 = arith.constant 0 : index
    %c0_9 = arith.constant 0 : index
    %15 = vector.load %arg2[%c0_7, %c0_8, %c0_9] : memref<3x16x16xf32, #tpu.memory_space<vmem>>, vector<1x16x16xf32>
    %16 = vector.shape_cast %15 : vector<1x16x16xf32> to vector<16x16xf32>
    %cst_10 = arith.constant dense<0.000000e+00> : vector<16x64xf32>
    %17 = tpu.matmul %16, %7, %cst_10 {dimension_numbers = #tpu.dot_dimension_numbers<[1], [0], [0], [1], [0, 0, 1, 1], [], []>} : vector<16x16xf32>, vector<16x64xf32>, vector<16x64xf32> -> vector<16x64xf32>
    %18 = arith.addf %14, %17 : vector<16x64xf32>
    %c2 = arith.constant 2 : index
    %c0_11 = arith.constant 0 : index
    %c0_12 = arith.constant 0 : index
    %19 = vector.load %arg2[%c2, %c0_11, %c0_12] : memref<3x16x16xf32, #tpu.memory_space<vmem>>, vector<1x16x16xf32>
    %20 = vector.shape_cast %19 : vector<1x16x16xf32> to vector<16x16xf32>
    %cst_13 = arith.constant dense<0.000000e+00> : vector<16x64xf32>
    %21 = tpu.matmul %20, %11, %cst_13 {dimension_numbers = #tpu.dot_dimension_numbers<[1], [0], [0], [1], [0, 0, 1, 1], [], []>} : vector<16x16xf32>, vector<16x64xf32>, vector<16x64xf32> -> vector<16x64xf32>
    %22 = arith.addf %18, %21 : vector<16x64xf32>
    %c0_14 = arith.constant 0 : index
    %c0_15 = arith.constant 0 : index
    %23 = vector.load %arg3[%c0_14, %c0_15] : memref<16x1xf32, #tpu.memory_space<vmem>>, vector<16x1xf32>
    %24 = vector.broadcast %23 : vector<16x1xf32> to vector<16x64xf32>
    %25 = arith.addf %22, %24 : vector<16x64xf32>
    %cst_16 = arith.constant 0.000000e+00 : f32
    %26 = vector.broadcast %cst_16 : f32 to vector<16x64xf32>
    %27 = arith.maximumf %25, %26 : vector<16x64xf32>
    %c0_17 = arith.constant 0 : index
    %c0_18 = arith.constant 0 : index
    %28 = vector.load %arg4[%c0_17, %c0_18] : memref<16x16xf32, #tpu.memory_space<vmem>>, vector<16x16xf32>
    %cst_19 = arith.constant dense<0.000000e+00> : vector<16x64xf32>
    %29 = tpu.matmul %28, %27, %cst_19 {dimension_numbers = #tpu.dot_dimension_numbers<[1], [0], [0], [1], [0, 0, 1, 1], [], []>} : vector<16x16xf32>, vector<16x64xf32>, vector<16x64xf32> -> vector<16x64xf32>
    %c0_20 = arith.constant 0 : index
    %c0_21 = arith.constant 0 : index
    %30 = vector.load %arg5[%c0_20, %c0_21] : memref<16x1xf32, #tpu.memory_space<vmem>>, vector<16x1xf32>
    %31 = vector.broadcast %30 : vector<16x1xf32> to vector<16x64xf32>
    %32 = arith.addf %29, %31 : vector<16x64xf32>
    %33 = arith.addf %1, %32 : vector<16x64xf32>
    %c0_22 = arith.constant 0 : index
    %c0_23 = arith.constant 0 : index
    %c0_24 = arith.constant 0 : index
    %34 = vector.load %arg6[%c0_22, %c0_23, %c0_24] : memref<1x16x64xf32, #tpu.memory_space<vmem>>, vector<1x16x64xf32>
    %35 = vector.shape_cast %34 : vector<1x16x64xf32> to vector<16x64xf32>
    %36 = vector.shape_cast %33 : vector<16x64xf32> to vector<1x16x64xf32>
    tpu.vector_store %arg6[%c0_22, %c0_23, %c0_24], %36 {strides = array<i32>} : memref<1x16x64xf32, #tpu.memory_space<vmem>>, vector<1x16x64xf32>,
    return
  }
  func.func @transform_0(%arg0: i32) -> (i32, i32, i32) {
    %c0_i32 = arith.constant 0 : i32
    %c0_i32_0 = arith.constant 0 : i32
    %c0_i32_1 = arith.constant 0 : i32
    return %arg0, %c0_i32, %c0_i32_0 : i32, i32, i32
  }
  func.func @transform_1(%arg0: i32) -> (i32, i32, i32) {
    %c0_i32 = arith.constant 0 : i32
    %c0_i32_0 = arith.constant 0 : i32
    %c0_i32_1 = arith.constant 0 : i32
    %c0_i32_2 = arith.constant 0 : i32
    return %c0_i32, %c0_i32_0, %c0_i32_1 : i32, i32, i32
  }
  func.func @transform_2(%arg0: i32) -> (i32, i32) {
    %c0_i32 = arith.constant 0 : i32
    %c0_i32_0 = arith.constant 0 : i32
    %c0_i32_1 = arith.constant 0 : i32
    return %c0_i32, %c0_i32_0 : i32, i32
  }
  func.func @transform_3(%arg0: i32) -> (i32, i32) {
    %c0_i32 = arith.constant 0 : i32
    %c0_i32_0 = arith.constant 0 : i32
    %c0_i32_1 = arith.constant 0 : i32
    return %c0_i32, %c0_i32_0 : i32, i32
  }
  func.func @transform_4(%arg0: i32) -> (i32, i32) {
    %c0_i32 = arith.constant 0 : i32
    %c0_i32_0 = arith.constant 0 : i32
    %c0_i32_1 = arith.constant 0 : i32
    return %c0_i32, %c0_i32_0 : i32, i32
  }
  func.func @transform_5(%arg0: i32) -> (i32, i32, i32) {
    %c0_i32 = arith.constant 0 : i32
    %c0_i32_0 = arith.constant 0 : i32
    %c0_i32_1 = arith.constant 0 : i32
    return %arg0, %c0_i32, %c0_i32_0 : i32, i32, i32
  }
}

</mosaic_0001>

<llo_original>
// kernel: tpu_custom_call.1
$region0: #{tpu_custom_call.1}
  #allocation0 [shape = 'u32[]', space=smem, size = 0x4, offset = 0x4, fixed_abs, tag = 'smem constant byte address 0x4 - core index']
  #allocation1 [shape = 'u32[144,128]{1,0:T(1,128)}', space=vmem, size = 0x12000, scoped, tag = 'internal scratch']
  %s0 = inlined_call_operand.vmem [shape: f32[2,16,64], index: 0, kind: input, shape index: {}]
  %s1 = inlined_call_operand.hbm [shape: f32[3,16,16], index: 1, kind: input, shape index: {}]
  %s2 = inlined_call_operand.vmem [shape: f32[16,1], index: 2, kind: input, shape index: {}]
  %s3 = inlined_call_operand.hbm [shape: f32[16,16], index: 3, kind: input, shape index: {}]
  %s4 = inlined_call_operand.vmem [shape: f32[16,1], index: 4, kind: input, shape index: {}]
  %s5 = inlined_call_operand.hbm [shape: f32[2,16,64], index: 5, kind: output, shape index: {}]
  %s6 = sld [smem:[#allocation0]]
  $region61: #{tpu_custom_call.1} parent=0
    _
  %s8 = ssub.s32 1, %s6
  %s9 = scalar_select 0, %s8, %s6
  $region1: #{tpu_custom_call.1} parent=0
    #allocation2 [shape = 'u8[24576]{0}', space=vmem, size = 0x6000, scoped, tag = 'input window, operand 1, single buffered']
    #allocation3 [shape = 's32[2]{0}', space=sflag, size = 0x8, scoped, tag = 'scoped memory for tpu_custom_call.1']
    #allocation4 [shape = 's32[2]{0}', space=sflag, size = 0x8, scoped, tag = 'scoped memory for tpu_custom_call.1']
    #allocation5 [shape = 'u8[8192]{0}', space=vmem, size = 0x2000, scoped, tag = 'input window, operand 3, single buffered']
    #allocation6 [shape = 's32[1]{0}', space=sflag, size = 0x4, scoped, tag = 'scoped memory for tpu_custom_call.1']
    #allocation7 [shape = 'u8[16384]{0}', space=vmem, size = 0x4000, scoped, tag = 'output window, operand 0']
    %10 = vsyncpa [#allocation3], 0
    %11 = vsyncpa [#allocation6], 0
    %12 = vsyncpa [#allocation4], 0
    %s13 = scalar_lea.sflag [#allocation4], 1
    %14 = vsyncpa %s13, 0
    loop: start=0, step=1, limit=4
    $region2: #{tpu_custom_call.1} parent=1 // loop_pre_header
      _
    $region3: #{tpu_custom_call.1} parent=1 // loop_header
      %s16 = sphi 0, %s20
      %p17 = scmp.ge.s32.totalorder %s16, 4
      %s26 = sphi 0, %s28
      %s29 = sphi 0, %s26
      %s30 = sphi 0, %s29
      %s46 = sphi 0, %s30
      %s50 = sphi 0, %s50
      %s52 = sphi 0, %s50
      %s53 = sphi 0, %s52
      %s67 = sphi 0, %s53
      %s71 = sphi 0, %s71
      %s73 = sphi 0, %s71
      %s74 = sphi 0, %s73
      %s88 = sphi 0, %s74
      %s92 = sphi 0, %s92
      %s94 = sphi 0, %s92
      %s95 = sphi 0, %s94
      %s109 = sphi 0, %s95
      %s113 = sphi 0, %s113
      %s115 = sphi 0, %s113
      %s116 = sphi 0, %s115
      %s130 = sphi 0, %s116
      %s136 = sphi 0, %s138
      %s139 = sphi 0, %s136
      %s140 = sphi 0, %s139
      %s156 = sphi 0, %s140
    $region4: #{tpu_custom_call.1} parent=1 // loop_header_branch
      %19 = sbr.rel (%p17) target = $region8
    $region5: #{tpu_custom_call.1} parent=1 // loop_body
      %s21 = ssub.s32 %s16, 1
      %s22 = ssub.s32 %s16, 2
      %s23 = sadd.s32 %s16, 1
      %s24 = ssub.s32 %s16, %s23
      %p25 = scmp.eq.s32.totalorder %s24, 0
      %s27 = sadd.s32 %s26, 1
      %s28 = scalar_select %p25, %s26, %s27
      %p31 = pneg %p25
      %p32 = scmp.eq.s32.totalorder %s16, 1
      %p33 = por %p31, %p32
      %p34 = scmp.ne.s32.totalorder %s26, %s29
      %p35 = scmp.eq.s32.totalorder %s16, 0
      %p36 = por %p34, %p35
      %p37 = scmp.ne.s32.totalorder %s26, %s29
      %p38 = scmp.eq.s32.totalorder %s21, 1
      %p39 = por %p37, %p38
      %p40 = scmp.ne.s32.totalorder %s29, %s30
      %p41 = scmp.eq.s32.totalorder %s21, 0
      %p42 = por %p40, %p41
      %p43 = scmp.ne.s32.totalorder %s29, %s30
      %p44 = scmp.eq.s32.totalorder %s22, 1
      %p45 = por %p43, %p44
      %p47 = scmp.ne.s32.totalorder %s30, %s46
      %p48 = scmp.eq.s32.totalorder %s22, 0
      %p49 = por %p47, %p48
      %s51 = sadd.s32 %s50, 1
      %p54 = scmp.eq.s32.totalorder %s16, 1
      %p55 = scmp.ne.s32.totalorder %s50, %s52
      %p56 = scmp.eq.s32.totalorder %s16, 0
      %p57 = por %p55, %p56
      %p58 = scmp.ne.s32.totalorder %s50, %s52
      %p59 = scmp.eq.s32.totalorder %s21, 1
      %p60 = por %p58, %p59
      %p61 = scmp.ne.s32.totalorder %s52, %s53
      %p62 = scmp.eq.s32.totalorder %s21, 0
      %p63 = por %p61, %p62
      %p64 = scmp.ne.s32.totalorder %s52, %s53
      %p65 = scmp.eq.s32.totalorder %s22, 1
      %p66 = por %p64, %p65
      %p68 = scmp.ne.s32.totalorder %s53, %s67
      %p69 = scmp.eq.s32.totalorder %s22, 0
      %p70 = por %p68, %p69
      %s72 = sadd.s32 %s71, 1
      %p75 = scmp.eq.s32.totalorder %s16, 1
      %p76 = scmp.ne.s32.totalorder %s71, %s73
      %p77 = scmp.eq.s32.totalorder %s16, 0
      %p78 = por %p76, %p77
      %p79 = scmp.ne.s32.totalorder %s71, %s73
      %p80 = scmp.eq.s32.totalorder %s21, 1
      %p81 = por %p79, %p80
      %p82 = scmp.ne.s32.totalorder %s73, %s74
      %p83 = scmp.eq.s32.totalorder %s21, 0
      %p84 = por %p82, %p83
      %p85 = scmp.ne.s32.totalorder %s73, %s74
      %p86 = scmp.eq.s32.totalorder %s22, 1
      %p87 = por %p85, %p86
      %p89 = scmp.ne.s32.totalorder %s74, %s88
      %p90 = scmp.eq.s32.totalorder %s22, 0
      %p91 = por %p89, %p90
      %s93 = sadd.s32 %s92, 1
      %p96 = scmp.eq.s32.totalorder %s16, 1
      %p97 = scmp.ne.s32.totalorder %s92, %s94
      %p98 = scmp.eq.s32.totalorder %s16, 0
      %p99 = por %p97, %p98
      %p100 = scmp.ne.s32.totalorder %s92, %s94
      %p101 = scmp.eq.s32.totalorder %s21, 1
      %p102 = por %p100, %p101
      %p103 = scmp.ne.s32.totalorder %s94, %s95
      %p104 = scmp.eq.s32.totalorder %s21, 0
      %p105 = por %p103, %p104
      %p106 = scmp.ne.s32.totalorder %s94, %s95
      %p107 = scmp.eq.s32.totalorder %s22, 1
      %p108 = por %p106, %p107
      %p110 = scmp.ne.s32.totalorder %s95, %s109
      %p111 = scmp.eq.s32.totalorder %s22, 0
      %p112 = por %p110, %p111
      %s114 = sadd.s32 %s113, 1
      %p117 = scmp.eq.s32.totalorder %s16, 1
      %p118 = scmp.ne.s32.totalorder %s113, %s115
      %p119 = scmp.eq.s32.totalorder %s16, 0
      %p120 = por %p118, %p119
      %p121 = scmp.ne.s32.totalorder %s113, %s115
      %p122 = scmp.eq.s32.totalorder %s21, 1
      %p123 = por %p121, %p122
      %p124 = scmp.ne.s32.totalorder %s115, %s116
      %p125 = scmp.eq.s32.totalorder %s21, 0
      %p126 = por %p124, %p125
      %p127 = scmp.ne.s32.totalorder %s115, %s116
      %p128 = scmp.eq.s32.totalorder %s22, 1
      %p129 = por %p127, %p128
      %p131 = scmp.ne.s32.totalorder %s116, %s130
      %p132 = scmp.eq.s32.totalorder %s22, 0
      %p133 = por %p131, %p132
      %s134 = ssub.s32 %s16, %s23
      %p135 = scmp.eq.s32.totalorder %s134, 0
      %s137 = sadd.s32 %s136, 1
      %s138 = scalar_select %p135, %s136, %s137
      %p141 = pneg %p135
      %p142 = scmp.eq.s32.totalorder %s16, 1
      %p143 = por %p141, %p142
      %p144 = scmp.ne.s32.totalorder %s136, %s139
      %p145 = scmp.eq.s32.totalorder %s16, 0
      %p146 = por %p144, %p145
      %p147 = scmp.ne.s32.totalorder %s136, %s139
      %p148 = scmp.eq.s32.totalorder %s21, 1
      %p149 = por %p147, %p148
      %p150 = scmp.ne.s32.totalorder %s139, %s140
      %p151 = scmp.eq.s32.totalorder %s21, 0
      %p152 = por %p150, %p151
      %p153 = scmp.ne.s32.totalorder %s139, %s140
      %p154 = scmp.eq.s32.totalorder %s22, 1
      %p155 = por %p153, %p154
      %p157 = scmp.ne.s32.totalorder %s140, %s156
      %p158 = scmp.eq.s32.totalorder %s22, 0
      %p159 = por %p157, %p158
      %p160 = scmp.le.s32.totalorder 1, %s16
      %p161 = scmp.lt.s32.totalorder %s16, 3
      %p162 = pnand %p160, %p161
      %p163 = pneg %p162
      // Predicated region
      $region9: #{tpu_custom_call.1} parent=5 // pred_check
        _
      $region10: #{tpu_custom_call.1} parent=5 // pred_check_branch
        %165 = sbr.rel (%p162) target = $region12
      $region11: #{tpu_custom_call.1} parent=5 // pred_region
        %s166 = ssub.s32 %s16, 1
        // Predicated region
        $region13: #{tpu_custom_call.1} parent=11 // pred_check
          %p167 = pneg %p63
        $region14: #{tpu_custom_call.1} parent=11 // pred_check_branch
          %169 = sbr.rel (%p167) target = $region16
        $region15: #{tpu_custom_call.1} parent=11 // pred_region
          %s171 = ssub.s32 768, 768
          %172 = vsyncadd [#allocation3], %s171
          %s173 = sshll.u32 [#allocation2], 4
          %s174 = int_to_ptr.vmem [resolvable:$true] %s173
          %179 = dma.hbm_to_vmem [thread:$0]  %s1, 768, %s174, [#allocation3], 128, 128, 8
        $region16: #{tpu_custom_call.1} parent=11 // pred_fallthru
          _
        // Predicated region
        $region17: #{tpu_custom_call.1} parent=11 // pred_check
          %p180 = pneg %p84
        $region18: #{tpu_custom_call.1} parent=11 // pred_check_branch
          %182 = sbr.rel (%p180) target = $region20
        $region19: #{tpu_custom_call.1} parent=11 // pred_region
          _
        $region20: #{tpu_custom_call.1} parent=11 // pred_fallthru
          _
        // Predicated region
        $region21: #{tpu_custom_call.1} parent=11 // pred_check
          %p183 = pneg %p105
        $region22: #{tpu_custom_call.1} parent=11 // pred_check_branch
          %185 = sbr.rel (%p183) target = $region24
        $region23: #{tpu_custom_call.1} parent=11 // pred_region
          %s187 = ssub.s32 256, 256
          %188 = vsyncadd [#allocation6], %s187
          %s189 = sshll.u32 [#allocation5], 4
          %s190 = int_to_ptr.vmem [resolvable:$true] %s189
          %195 = dma.hbm_to_vmem [thread:$0]  %s3, 256, %s190, [#allocation6], 128, 128, 8
        $region24: #{tpu_custom_call.1} parent=11 // pred_fallthru
          _
        // Predicated region
        $region25: #{tpu_custom_call.1} parent=11 // pred_check
          %p196 = pneg %p126
        $region26: #{tpu_custom_call.1} parent=11 // pred_check_branch
          %198 = sbr.rel (%p196) target = $region28
        $region27: #{tpu_custom_call.1} parent=11 // pred_region
          _
        $region28: #{tpu_custom_call.1} parent=11 // pred_fallthru
          _
      $region12: #{tpu_custom_call.1} parent=5 // pred_fallthru
        _
      %p199 = scmp.lt.s32.totalorder %s16, 2
      // Predicated region
      $region29: #{tpu_custom_call.1} parent=5 // pred_check
        %p200 = pneg %p199
      $region30: #{tpu_custom_call.1} parent=5 // pred_check_branch
        %202 = sbr.rel (%p200) target = $region32
      $region31: #{tpu_custom_call.1} parent=5 // pred_region
        // Predicated region
        $region33: #{tpu_custom_call.1} parent=31 // pred_check
          %p203 = pneg %p36
        $region34: #{tpu_custom_call.1} parent=31 // pred_check_branch
          %205 = sbr.rel (%p203) target = $region36
        $region35: #{tpu_custom_call.1} parent=31 // pred_region
          %p206 = scmp.lt.s32.totalorder %s16, 1
          %s207 = scalar_select %p206, %s16, 1
          %s208 = smul.addr %s207, 2
          %s209 = smul.addr %s208, 8
          %s210 = scalar_lea.vmem %s0, %s209
        $region36: #{tpu_custom_call.1} parent=31 // pred_fallthru
          _
      $region32: #{tpu_custom_call.1} parent=5 // pred_fallthru
        _
      %p211 = scmp.le.s32.totalorder 1, %s16
      %p212 = scmp.lt.s32.totalorder %s16, 3
      %p213 = pnand %p211, %p212
      %p214 = pneg %p213
      // Predicated region
      $region37: #{tpu_custom_call.1} parent=5 // pred_check
        _
      $region38: #{tpu_custom_call.1} parent=5 // pred_check_branch
        %216 = sbr.rel (%p213) target = $region40
      $region39: #{tpu_custom_call.1} parent=5 // pred_region
        %s217 = ssub.s32 %s16, 1
        // Predicated region
        $region41: #{tpu_custom_call.1} parent=39 // pred_check
          %p218 = pneg %p63
        $region42: #{tpu_custom_call.1} parent=39 // pred_check_branch
          %220 = sbr.rel (%p218) target = $region44
        $region43: #{tpu_custom_call.1} parent=39 // pred_region
          %221 = dma.done [#allocation3], 768
        $region44: #{tpu_custom_call.1} parent=39 // pred_fallthru
          _
        // Predicated region
        $region45: #{tpu_custom_call.1} parent=39 // pred_check
          %p222 = pneg %p105
        $region46: #{tpu_custom_call.1} parent=39 // pred_check_branch
          %224 = sbr.rel (%p222) target = $region48
        $region47: #{tpu_custom_call.1} parent=39 // pred_region
          %225 = dma.done [#allocation6], 256
        $region48: #{tpu_custom_call.1} parent=39 // pred_fallthru
          _
        %p226 = scmp.lt.s32.totalorder %s21, 1
        %s227 = scalar_select %p226, %s21, 1
        %s228 = smul.addr %s227, 2
        %s229 = smul.addr %s228, 8
        %s230 = scalar_lea.vmem %s0, %s229
        %p231 = pneg %p42
        %p232 = pneg %p39
        %p233 = pneg %p63
        %p234 = pneg %p60
        %p235 = pneg %p84
        %p236 = pneg %p81
        %p237 = pneg %p105
        %p238 = pneg %p102
        %p239 = pneg %p126
        %p240 = pneg %p123
        %p241 = pneg %p152
        %p242 = pneg %p149
        %s243 = sand.u32 %s139, 1
        %s244 = scalar_lea.sflag [#allocation4], %s243
        %s245 = sand.u32 %s139, 1
        %s246 = smul.addr %s245, 16
        %s247 = scalar_lea.vmem [#allocation7], %s246
        %p248 = scmp.lt.s32.totalorder %s21, 1
        %s249 = scalar_select %p248, %s21, 1
        %s250 = smul.addr %s249, 2
        %s251 = smul.addr %s250, 8
        %s252 = scalar_lea.vmem %s0, %s251
        %v253 = vld [vmem:[%s252] sm:$0xff]
        %v254 = vld [vmem:[%s252 + $0x8] sm:$0xff]
        %v255 = vlaneseq
        %v256 = vand.u32 %v255, 127
        %vm257 = vcmp.ge.s32.totalorder %v256, 2
        %vm258 = vcmask 1048064
        %259 = vrot.lane.b32.xlu0 %v253, 64
        %v260 = vpop.permute.xlu0 %259
        %v261 = vsel %vm258, %v260, %v253
        %262 = vrot.lane.b32.xlu0 %v254, 64
        %v263 = vpop.permute.xlu0 %262
        %v264 = vsel %vm258, %v263, %v254
        %265 = vrot.lane.b32.xlu0 %v261, 64
        %v266 = vpop.permute.xlu0 %265
        %267 = vrot.lane.b32.xlu0 %v264, 64
        %v268 = vpop.permute.xlu0 %267
        %v269 = vsel %vm258, %v266, %v253
        %v270 = vsel %vm258, %v268, %v254
        %273 = vrot.lane.b32.xlu0 %v269, 66
        %v274 = vpop.permute.xlu0 %273
        %275 = vrot.lane.b32.xlu0 %v270, 66
        %v276 = vpop.permute.xlu0 %275
        %v279 = vsel %vm257, %v274, 0.0
        %v280 = vsel %vm257, %v276, 0.0
        %vm281 = vcmp.lt.s32.totalorder %v256, 62
        %282 = vrot.lane.b32.xlu0 %v269, 126
        %v283 = vpop.permute.xlu0 %282
        %284 = vrot.lane.b32.xlu0 %v270, 126
        %v285 = vpop.permute.xlu0 %284
        %v288 = vsel %vm281, %v283, 0.0
        %v289 = vsel %vm281, %v285, 0.0
        %s290 = scalar_lea.vmem [#allocation2], 16
        %v291 = vld [vmem:[%s290] sm:$0xff]
        %v292 = vld [vmem:[%s290 + $0x8] sm:$0xff]
        %v293 = vld [vmem:[#allocation2] sm:$0xff]
        %v294 = vld [vmem:[#allocation2 + $0x8] sm:$0xff]
        %vm295 = vcmask 130048
        %v297 = vsel %vm295, %v293, 0
        %v300 = vsel %vm295, %v294, 0
        %302 = vmatprep.subr.mxu0 0.0
        %303 = vmatpush1.msra.mxu0 0.0
        %304 = vmatprep.subr.mxu0 0.0
        %305 = vmatpush1.msra.mxu0 0.0
        %306 = vmatprep.subr.mxu0 0.0
        %307 = vmatpush1.msra.mxu0 0.0
        %308 = vmatprep.subr.mxu0 0.0
        %309 = vmatpush1.msra.mxu0 0.0
        %310 = vmatprep.subr.mxu0 0.0
        %311 = vmatpush1.msra.mxu0 0.0
        %312 = vmatprep.subr.mxu0 0.0
        %313 = vmatpush1.msra.mxu0 0.0
        %314 = vmatprep.subr.mxu0 0.0
        %315 = vmatpush1.msra.mxu0 0.0
        %316 = vmatprep.subr.mxu0 0.0
        %317 = vmatpush1.msra.mxu0 0.0
        %318 = vmatprep.subr.mxu0 0.0
        %319 = vmatpush1.msra.mxu0 0.0
        %320 = vmatprep.subr.mxu0 0.0
        %321 = vmatpush1.msra.mxu0 0.0
        %322 = vmatprep.subr.mxu0 0.0
        %323 = vmatpush1.msra.mxu0 0.0
        %324 = vmatprep.subr.mxu0 0.0
        %325 = vmatpush1.msra.mxu0 0.0
        %326 = vmatprep.subr.mxu0 0.0
        %327 = vmatpush1.msra.mxu0 0.0
        %328 = vmatprep.subr.mxu0 0.0
        %329 = vmatpush1.msra.mxu0 0.0
        %330 = vmatprep.subr.mxu0 0.0
        %331 = vmatpush1.msra.mxu0 %v280
        %332 = vmatprep.subr.mxu0 0.0
        %333 = vmatpush1.msra.mxu0 %v279
        %334 = vmatprep.subr.mxu0 0.0
        %335 = vmatpush2.msra.mxu0 0.0
        %336 = vmatprep.subr.mxu0 0.0
        %337 = vmatpush2.msra.mxu0 0.0
        %338 = vmatprep.subr.mxu0 0.0
        %339 = vmatpush2.msra.mxu0 0.0
        %340 = vmatprep.subr.mxu0 0.0
        %341 = vmatpush2.msra.mxu0 0.0
        %342 = vmatprep.subr.mxu0 0.0
        %343 = vmatpush2.msra.mxu0 0.0
        %344 = vmatprep.subr.mxu0 0.0
        %345 = vmatpush2.msra.mxu0 0.0
        %346 = vmatprep.subr.mxu0 0.0
        %347 = vmatpush2.msra.mxu0 0.0
        %348 = vmatprep.subr.mxu0 0.0
        %349 = vmatpush2.msra.mxu0 0.0
        %350 = vmatprep.subr.mxu0 0.0
        %351 = vmatpush2.msra.mxu0 0.0
        %352 = vmatprep.subr.mxu0 0.0
        %353 = vmatpush2.msra.mxu0 0.0
        %354 = vmatprep.subr.mxu0 0.0
        %355 = vmatpush2.msra.mxu0 0.0
        %356 = vmatprep.subr.mxu0 0.0
        %357 = vmatpush2.msra.mxu0 0.0
        %358 = vmatprep.subr.mxu0 0.0
        %359 = vmatpush2.msra.mxu0 0.0
        %360 = vmatprep.subr.mxu0 0.0
        %361 = vmatpush2.msra.mxu0 0.0
        %362 = vmatprep.subr.mxu0 0.0
        %363 = vmatpush2.msra.mxu0 0.0
        %364 = vmatprep.subr.mxu0 0.0
        %365 = vmatpush2.msra.mxu0 0.0
        %366 = vmatprep.mubr.f32.mxu0 0.0
        %367 = vmatmul.mubr.f32.gmra.mxu0 %v297
        %v368 = vpop.f32.mrf.mxu0
        %v369 = vadd.f32 0.0, %v368
        %v370 = vpop.f32.mrf.mxu0
        %371 = vmatprep.mubr.f32.mxu0 0.0
        %372 = vmatmul.mubr.f32.gmra.mxu0 %v300
        %v373 = vpop.f32.mrf.mxu0
        %v374 = vadd.f32 0.0, %v373
        %v375 = vpop.f32.mrf.mxu0
        %376 = vdwg.mxu0
        %v378 = vsel %vm295, %v291, 0
        %v381 = vsel %vm295, %v292, 0
        %383 = vmatprep.subr.mxu0 0.0
        %384 = vmatpush1.msra.mxu0 0.0
        %385 = vmatprep.subr.mxu0 0.0
        %386 = vmatpush1.msra.mxu0 0.0
        %387 = vmatprep.subr.mxu0 0.0
        %388 = vmatpush1.msra.mxu0 0.0
        %389 = vmatprep.subr.mxu0 0.0
        %390 = vmatpush1.msra.mxu0 0.0
        %391 = vmatprep.subr.mxu0 0.0
        %392 = vmatpush1.msra.mxu0 0.0
        %393 = vmatprep.subr.mxu0 0.0
        %394 = vmatpush1.msra.mxu0 0.0
        %395 = vmatprep.subr.mxu0 0.0
        %396 = vmatpush1.msra.mxu0 0.0
        %397 = vmatprep.subr.mxu0 0.0
        %398 = vmatpush1.msra.mxu0 0.0
        %399 = vmatprep.subr.mxu0 0.0
        %400 = vmatpush1.msra.mxu0 0.0
        %401 = vmatprep.subr.mxu0 0.0
        %402 = vmatpush1.msra.mxu0 0.0
        %403 = vmatprep.subr.mxu0 0.0
        %404 = vmatpush1.msra.mxu0 0.0
        %405 = vmatprep.subr.mxu0 0.0
        %406 = vmatpush1.msra.mxu0 0.0
        %407 = vmatprep.subr.mxu0 0.0
        %408 = vmatpush1.msra.mxu0 0.0
        %409 = vmatprep.subr.mxu0 0.0
        %410 = vmatpush1.msra.mxu0 0.0
        %411 = vmatprep.subr.mxu0 0.0
        %412 = vmatpush1.msra.mxu0 %v254
        %413 = vmatprep.subr.mxu0 0.0
        %414 = vmatpush1.msra.mxu0 %v253
        %415 = vmatprep.subr.mxu0 0.0
        %416 = vmatpush2.msra.mxu0 0.0
        %417 = vmatprep.subr.mxu0 0.0
        %418 = vmatpush2.msra.mxu0 0.0
        %419 = vmatprep.subr.mxu0 0.0
        %420 = vmatpush2.msra.mxu0 0.0
        %421 = vmatprep.subr.mxu0 0.0
        %422 = vmatpush2.msra.mxu0 0.0
        %423 = vmatprep.subr.mxu0 0.0
        %424 = vmatpush2.msra.mxu0 0.0
        %425 = vmatprep.subr.mxu0 0.0
        %426 = vmatpush2.msra.mxu0 0.0
        %427 = vmatprep.subr.mxu0 0.0
        %428 = vmatpush2.msra.mxu0 0.0
        %429 = vmatprep.subr.mxu0 0.0
        %430 = vmatpush2.msra.mxu0 0.0
        %431 = vmatprep.subr.mxu0 0.0
        %432 = vmatpush2.msra.mxu0 0.0
        %433 = vmatprep.subr.mxu0 0.0
        %434 = vmatpush2.msra.mxu0 0.0
        %435 = vmatprep.subr.mxu0 0.0
        %436 = vmatpush2.msra.mxu0 0.0
        %437 = vmatprep.subr.mxu0 0.0
        %438 = vmatpush2.msra.mxu0 0.0
        %439 = vmatprep.subr.mxu0 0.0
        %440 = vmatpush2.msra.mxu0 0.0
        %441 = vmatprep.subr.mxu0 0.0
        %442 = vmatpush2.msra.mxu0 0.0
        %443 = vmatprep.subr.mxu0 0.0
        %444 = vmatpush2.msra.mxu0 0.0
        %445 = vmatprep.subr.mxu0 0.0
        %446 = vmatpush2.msra.mxu0 0.0
        %447 = vmatprep.mubr.f32.mxu0 0.0
        %448 = vmatmul.mubr.f32.gmra.mxu0 %v378
        %v449 = vpop.f32.mrf.mxu0
        %v450 = vadd.f32 %v369, %v449
        %v451 = vpop.f32.mrf.mxu0
        %452 = vmatprep.mubr.f32.mxu0 0.0
        %453 = vmatmul.mubr.f32.gmra.mxu0 %v381
        %v454 = vpop.f32.mrf.mxu0
        %v455 = vadd.f32 %v374, %v454
        %v456 = vpop.f32.mrf.mxu0
        %457 = vdwg.mxu0
        %s458 = scalar_lea.vmem [#allocation2], 32
        %v459 = vld [vmem:[%s458] sm:$0xff]
        %v460 = vld [vmem:[%s458 + $0x8] sm:$0xff]
        %v462 = vsel %vm295, %v459, 0
        %v465 = vsel %vm295, %v460, 0
        %467 = vmatprep.subr.mxu0 0.0
        %468 = vmatpush1.msra.mxu0 0.0
        %469 = vmatprep.subr.mxu0 0.0
        %470 = vmatpush1.msra.mxu0 0.0
        %471 = vmatprep.subr.mxu0 0.0
        %472 = vmatpush1.msra.mxu0 0.0
        %473 = vmatprep.subr.mxu0 0.0
        %474 = vmatpush1.msra.mxu0 0.0
        %475 = vmatprep.subr.mxu0 0.0
        %476 = vmatpush1.msra.mxu0 0.0
        %477 = vmatprep.subr.mxu0 0.0
        %478 = vmatpush1.msra.mxu0 0.0
        %479 = vmatprep.subr.mxu0 0.0
        %480 = vmatpush1.msra.mxu0 0.0
        %481 = vmatprep.subr.mxu0 0.0
        %482 = vmatpush1.msra.mxu0 0.0
        %483 = vmatprep.subr.mxu0 0.0
        %484 = vmatpush1.msra.mxu0 0.0
        %485 = vmatprep.subr.mxu0 0.0
        %486 = vmatpush1.msra.mxu0 0.0
        %487 = vmatprep.subr.mxu0 0.0
        %488 = vmatpush1.msra.mxu0 0.0
        %489 = vmatprep.subr.mxu0 0.0
        %490 = vmatpush1.msra.mxu0 0.0
        %491 = vmatprep.subr.mxu0 0.0
        %492 = vmatpush1.msra.mxu0 0.0
        %493 = vmatprep.subr.mxu0 0.0
        %494 = vmatpush1.msra.mxu0 0.0
        %495 = vmatprep.subr.mxu0 0.0
        %496 = vmatpush1.msra.mxu0 %v289
        %497 = vmatprep.subr.mxu0 0.0
        %498 = vmatpush1.msra.mxu0 %v288
        %499 = vmatprep.subr.mxu0 0.0
        %500 = vmatpush2.msra.mxu0 0.0
        %501 = vmatprep.subr.mxu0 0.0
        %502 = vmatpush2.msra.mxu0 0.0
        %503 = vmatprep.subr.mxu0 0.0
        %504 = vmatpush2.msra.mxu0 0.0
        %505 = vmatprep.subr.mxu0 0.0
        %506 = vmatpush2.msra.mxu0 0.0
        %507 = vmatprep.subr.mxu0 0.0
        %508 = vmatpush2.msra.mxu0 0.0
        %509 = vmatprep.subr.mxu0 0.0
        %510 = vmatpush2.msra.mxu0 0.0
        %511 = vmatprep.subr.mxu0 0.0
        %512 = vmatpush2.msra.mxu0 0.0
        %513 = vmatprep.subr.mxu0 0.0
        %514 = vmatpush2.msra.mxu0 0.0
        %515 = vmatprep.subr.mxu0 0.0
        %516 = vmatpush2.msra.mxu0 0.0
        %517 = vmatprep.subr.mxu0 0.0
        %518 = vmatpush2.msra.mxu0 0.0
        %519 = vmatprep.subr.mxu0 0.0
        %520 = vmatpush2.msra.mxu0 0.0
        %521 = vmatprep.subr.mxu0 0.0
        %522 = vmatpush2.msra.mxu0 0.0
        %523 = vmatprep.subr.mxu0 0.0
        %524 = vmatpush2.msra.mxu0 0.0
        %525 = vmatprep.subr.mxu0 0.0
        %526 = vmatpush2.msra.mxu0 0.0
        %527 = vmatprep.subr.mxu0 0.0
        %528 = vmatpush2.msra.mxu0 0.0
        %529 = vmatprep.subr.mxu0 0.0
        %530 = vmatpush2.msra.mxu0 0.0
        %531 = vmatprep.mubr.f32.mxu0 0.0
        %532 = vmatmul.mubr.f32.gmra.mxu0 %v462
        %v533 = vpop.f32.mrf.mxu0
        %v534 = vadd.f32 0.0, %v533
        %v535 = vpop.f32.mrf.mxu0
        %536 = vmatprep.mubr.f32.mxu0 0.0
        %537 = vmatmul.mubr.f32.gmra.mxu0 %v465
        %v538 = vpop.f32.mrf.mxu0
        %v539 = vadd.f32 0.0, %v538
        %v540 = vpop.f32.mrf.mxu0
        %541 = vdwg.mxu0
        %v542 = vadd.f32 %v450, %v534
        %v543 = vadd.f32 %v455, %v539
        %v544 = vld [vmem:[%s2] sm:$0xff]
        %v545 = vld [vmem:[%s2 + $0x8] sm:$0xff]
        %547 = vset.pattern.permute.xlu0 0
        %548 = vperm.xlu0 %547, %v544
        %v549 = vpop.permute.xlu0 %548
        %552 = vset.pattern.permute.xlu0 0
        %553 = vperm.xlu0 %552, %v545
        %v554 = vpop.permute.xlu0 %553
        %v556 = vadd.f32 %v542, %v549
        %v557 = vadd.f32 %v543, %v554
        %v558 = vmax.f32 %v556, 0.0
        %v559 = vmax.f32 %v557, 0.0
        %v560 = vld [vmem:[#allocation5] sm:$0xff]
        %v561 = vld [vmem:[#allocation5 + $0x8] sm:$0xff]
        %v562 = vld [vmem:[%s4] sm:$0xff]
        %v563 = vld [vmem:[%s4 + $0x8] sm:$0xff]
        %565 = vset.pattern.permute.xlu0 0
        %566 = vperm.xlu0 %565, %v562
        %v567 = vpop.permute.xlu0 %566
        %570 = vset.pattern.permute.xlu0 0
        %571 = vperm.xlu0 %570, %v563
        %v572 = vpop.permute.xlu0 %571
        %v575 = vsel %vm295, %v560, 0
        %v578 = vsel %vm295, %v561, 0
        %580 = vmatprep.subr.mxu0 0.0
        %581 = vmatpush1.msra.mxu0 0.0
        %582 = vmatprep.subr.mxu0 0.0
        %583 = vmatpush1.msra.mxu0 0.0
        %584 = vmatprep.subr.mxu0 0.0
        %585 = vmatpush1.msra.mxu0 0.0
        %586 = vmatprep.subr.mxu0 0.0
        %587 = vmatpush1.msra.mxu0 0.0
        %588 = vmatprep.subr.mxu0 0.0
        %589 = vmatpush1.msra.mxu0 0.0
        %590 = vmatprep.subr.mxu0 0.0
        %591 = vmatpush1.msra.mxu0 0.0
        %592 = vmatprep.subr.mxu0 0.0
        %593 = vmatpush1.msra.mxu0 0.0
        %594 = vmatprep.subr.mxu0 0.0
        %595 = vmatpush1.msra.mxu0 0.0
        %596 = vmatprep.subr.mxu0 0.0
        %597 = vmatpush1.msra.mxu0 0.0
        %598 = vmatprep.subr.mxu0 0.0
        %599 = vmatpush1.msra.mxu0 0.0
        %600 = vmatprep.subr.mxu0 0.0
        %601 = vmatpush1.msra.mxu0 0.0
        %602 = vmatprep.subr.mxu0 0.0
        %603 = vmatpush1.msra.mxu0 0.0
        %604 = vmatprep.subr.mxu0 0.0
        %605 = vmatpush1.msra.mxu0 0.0
        %606 = vmatprep.subr.mxu0 0.0
        %607 = vmatpush1.msra.mxu0 0.0
        %608 = vmatprep.subr.mxu0 0.0
        %609 = vmatpush1.msra.mxu0 %v559
        %610 = vmatprep.subr.mxu0 0.0
        %611 = vmatpush1.msra.mxu0 %v558
        %612 = vmatprep.subr.mxu0 0.0
        %613 = vmatpush2.msra.mxu0 0.0
        %614 = vmatprep.subr.mxu0 0.0
        %615 = vmatpush2.msra.mxu0 0.0
        %616 = vmatprep.subr.mxu0 0.0
        %617 = vmatpush2.msra.mxu0 0.0
        %618 = vmatprep.subr.mxu0 0.0
        %619 = vmatpush2.msra.mxu0 0.0
        %620 = vmatprep.subr.mxu0 0.0
        %621 = vmatpush2.msra.mxu0 0.0
        %622 = vmatprep.subr.mxu0 0.0
        %623 = vmatpush2.msra.mxu0 0.0
        %624 = vmatprep.subr.mxu0 0.0
        %625 = vmatpush2.msra.mxu0 0.0
        %626 = vmatprep.subr.mxu0 0.0
        %627 = vmatpush2.msra.mxu0 0.0
        %628 = vmatprep.subr.mxu0 0.0
        %629 = vmatpush2.msra.mxu0 0.0
        %630 = vmatprep.subr.mxu0 0.0
        %631 = vmatpush2.msra.mxu0 0.0
        %632 = vmatprep.subr.mxu0 0.0
        %633 = vmatpush2.msra.mxu0 0.0
        %634 = vmatprep.subr.mxu0 0.0
        %635 = vmatpush2.msra.mxu0 0.0
        %636 = vmatprep.subr.mxu0 0.0
        %637 = vmatpush2.msra.mxu0 0.0
        %638 = vmatprep.subr.mxu0 0.0
        %639 = vmatpush2.msra.mxu0 0.0
        %640 = vmatprep.subr.mxu0 0.0
        %641 = vmatpush2.msra.mxu0 0.0
        %642 = vmatprep.subr.mxu0 0.0
        %643 = vmatpush2.msra.mxu0 0.0
        %644 = vmatprep.mubr.f32.mxu0 0.0
        %645 = vmatmul.mubr.f32.gmra.mxu0 %v575
        %v646 = vpop.f32.mrf.mxu0
        %v647 = vadd.f32 %v567, %v646
        %v648 = vpop.f32.mrf.mxu0
        %649 = vmatprep.mubr.f32.mxu0 0.0
        %650 = vmatmul.mubr.f32.gmra.mxu0 %v578
        %v651 = vpop.f32.mrf.mxu0
        %v652 = vadd.f32 %v572, %v651
        %v653 = vpop.f32.mrf.mxu0
        %654 = vdwg.mxu0
        %v655 = vadd.f32 %v253, %v647
        %v656 = vadd.f32 %v254, %v652
        %vm657 = vcmask 523264
        %658 = vst.msk [vmem:[%s247] sm:$0xff] %vm657, %v655
        %659 = vst.msk [vmem:[%s247 + $0x8] sm:$0xff] %vm657, %v656
        %s660 = sand.u32 %s139, 1
        %s661 = scalar_lea.sflag [#allocation4], %s660
        %s662 = sand.u32 %s139, 1
        %s663 = smul.addr %s662, 16
        %s664 = scalar_lea.vmem [#allocation7], %s663
        // Predicated region
        $region49: #{tpu_custom_call.1} parent=39 // pred_check
          %p665 = pneg %p149
        $region50: #{tpu_custom_call.1} parent=39 // pred_check_branch
          %667 = sbr.rel (%p665) target = $region52
        $region51: #{tpu_custom_call.1} parent=39 // pred_region
          %s669 = ssub.s32 256, 256
          %670 = vsyncadd %s661, %s669
          %s671 = smul.addr %s21, 2
          %s672 = smul.addr %s671, 128
          %s673 = scalar_lea.hbm %s5, %s672
          %s674 = sshll.u32 %s664, 4
          %s675 = int_to_ptr.vmem [resolvable:$true] %s674
          %680 = dma.vmem_to_hbm [thread:$0]  %s675, 256, %s673, %s661, 128, 128, 8
        $region52: #{tpu_custom_call.1} parent=39 // pred_fallthru
          _
      $region40: #{tpu_custom_call.1} parent=5 // pred_fallthru
        _
      %p681 = scmp.le.s32.totalorder 2, %s16
      // Predicated region
      $region53: #{tpu_custom_call.1} parent=5 // pred_check
        %p682 = pneg %p681
      $region54: #{tpu_custom_call.1} parent=5 // pred_check_branch
        %684 = sbr.rel (%p682) target = $region56
      $region55: #{tpu_custom_call.1} parent=5 // pred_region
        %s685 = ssub.s32 %s16, 2
        // Predicated region
        $region57: #{tpu_custom_call.1} parent=55 // pred_check
          %p686 = pneg %p155
        $region58: #{tpu_custom_call.1} parent=55 // pred_check_branch
          %688 = sbr.rel (%p686) target = $region60
        $region59: #{tpu_custom_call.1} parent=55 // pred_region
          %s689 = sand.u32 %s140, 1
          %s690 = scalar_lea.sflag [#allocation4], %s689
          %s691 = sand.u32 %s140, 1
          %s692 = smul.addr %s691, 16
          %s693 = scalar_lea.vmem [#allocation7], %s692
          %694 = dma.done %s690, 256
        $region60: #{tpu_custom_call.1} parent=55 // pred_fallthru
          _
      $region56: #{tpu_custom_call.1} parent=5 // pred_fallthru
        _
    $region6: #{tpu_custom_call.1} parent=1 // loop_footer
      %s20 = sadd.s32 1, %s16
    $region7: #{tpu_custom_call.1} parent=1 // loop_footer_branch
      %15 = sbr.rel target = $region3
    $region8: #{tpu_custom_call.1} parent=1 // loop_exit
      _
    %695 = vsyncpa [#allocation3], 1
    %s696 = scalar_lea.sflag [#allocation3], 1
    %697 = vsyncpa %s696, 1
    %698 = vsyncpa [#allocation6], 1
    %699 = vsyncpa [#allocation4], 1
    %s700 = scalar_lea.sflag [#allocation4], 1
    %701 = vsyncpa %s700, 1

</llo_original>
